<compile_context>
chip_gen: v5e
topology: v5e:2x2
jax: 0.10.0
libtpu: 0.0.40
codegen_flags: <defaults>
</compile_context>

<pallas_src>
import jax
import jax.numpy as jnp
from jax.experimental import pallas as pl
from jax.experimental.pallas import tpu as pltpu


def attention_pool_kernel(x_ref, vw_ref, w2_ref, pooled_ref, a_ref):
    # x_ref:      (TB, N, F) block of batch elements (native dtype)
    # vw_ref:     (F, H)     attention_V first linear weight (pre-transposed)
    # w2_ref:     (1, H)     attention_V second linear weight (PyTorch row layout)
    # pooled_ref: (TB, F)    pooled features (lane-dense: F on lanes)
    # a_ref:      (TB, N)    raw attention logits (lane-dense: N on lanes)
    tb, n, f = x_ref.shape
    x = x_ref[...]                                   # native dtype; MXU takes bf16/f32 directly
    x2d = x.reshape(tb * n, f)                       # free leading-dim collapse when N % 8 == 0

    # Linear(F->H, no bias) on the MXU, f32 accumulation; tanh on the EUP.
    h = jnp.tanh(jnp.dot(x2d, vw_ref[...], preferred_element_type=jnp.float32))   # (TB*N, H) f32

    # Linear(H->1, no bias): VPU multiply + cross-lane reduce (a width-1 MXU
    # matmul would waste a full systolic pass).
    a2d = jnp.sum(h * w2_ref[...].astype(jnp.float32), axis=-1, keepdims=True)    # (TB*N, 1) f32
    a = a2d.reshape(tb, n)                           # lane-dense logits (tiny relayout)
    a_ref[...] = a.astype(a_ref.dtype)

    # softmax over the instance axis (now the lane axis -> cheap XLU reductions).
    m = jnp.max(a, axis=-1, keepdims=True)                                          # (TB, 1)
    e = jnp.exp(a - m)                                                              # (TB, N)
    w = e * pl.reciprocal(jnp.sum(e, axis=-1, keepdims=True), approx=False)         # (TB, N) f32

    # Weighted sum over instances on the VPU.  w is cast to x.dtype so the
    # (TB, N, F) product stays x-dtype sized (no 4 B/elem blow-up for bf16);
    # the reduction itself accumulates in f32.
    wx = x * w[:, :, None].astype(x.dtype)                                          # (TB, N, F)
    pooled = jnp.sum(wx.astype(jnp.float32), axis=1)                                # (TB, F) f32
    pooled_ref[...] = pooled.astype(pooled_ref.dtype)


def _round_up(v, m):
    return ((v + m - 1) // m) * m


def _vmem_bytes_per_step(tb, n, f, hid, x_itemsize, out_itemsize):
    """Conservative per-grid-step VMEM footprint, padded to (8,128) tiles."""
    n8, n128 = _round_up(n, 8), _round_up(n, 128)
    f128 = _round_up(f, 128)
    h128 = _round_up(hid, 128)
    tb8 = _round_up(tb, 8)
    x_in   = 2 * tb * n8 * f128 * x_itemsize       # double-buffered x input block
    h_tmp  = 2 * tb * n8 * h128 * 4                # matmul result + tanh output (f32)
    a_tmp  = 4 * tb8 * n128 * 4                    # logits / exp / softmax-weight temporaries
    wx_tmp = tb * n8 * f128 * 4                    # weighted product (worst-case f32)
    o_pool = 2 * tb8 * f128 * out_itemsize         # double-buffered pooled output block
    o_a    = 2 * tb8 * n128 * out_itemsize         # double-buffered A output block
    wts    = 2 * (_round_up(f, 8) + 8) * h128 * 4  # resident Vw + w2 weight buffers
    return x_in + h_tmp + a_tmp + wx_tmp + o_pool + o_a + wts


def _vmem_capacity_bytes():
    try:
        cap = getattr(pltpu.get_tpu_info(), "vmem_capacity_bytes", None)
        if cap:
            return int(cap)
    except Exception:
        pass
    return 64 * 1024 * 1024    # conservative fallback = v7x per-TensorCore VMEM


def _pick_block_b(batch, n, f, hid, x_itemsize, out_itemsize, budget_bytes,
                  min_grid_steps=4):
    """Largest 8-aligned, batch-dividing block whose per-step footprint fits."""
    if batch < 8 or batch % 8 != 0:
        # Full-batch block: the second-minor output dims equal the full array
        # dim, which always satisfies the (8,128) block-shape rule.
        return batch
    candidates = [tb for tb in range(8, batch + 1, 8) if batch % tb == 0]
    fitting = [tb for tb in candidates
               if _vmem_bytes_per_step(tb, n, f, hid, x_itemsize, out_itemsize)
               <= budget_bytes]
    tb = max(fitting) if fitting else 8
    # Keep >= min_grid_steps grid steps when the batch allows (>= 2 per v7x
    # TensorCore) so the double-buffered pipeline actually hides the x DMA;
    # the ~0.35 us per-step overhead is trivial next to multi-MiB x blocks.
    while tb > 8 and (batch + tb - 1) // tb < min_grid_steps:
        smaller = [c for c in candidates if c < tb]
        if not smaller:
            break
        tb = max(smaller)
    return tb


def attention_pool(x, v_weight, w2_weight, *, block_b=None):
    """x: (B, N, F); v_weight: (H, F) PyTorch layout; w2_weight: (1, H) PyTorch layout.

    Returns (pooled (B, F), A (B, N, 1)) matching AttentionPool.forward in eval
    mode with gated=False (dropout = identity).
    """
    B, N, F = x.shape
    H = v_weight.shape[0]
    vw = v_weight.T              # (F, H): row-major MXU operand
    w2 = w2_weight               # (1, H): kept as a row for the VPU reduce

    x_itemsize = jnp.dtype(x.dtype).itemsize
    capacity = _vmem_capacity_bytes()
    budget = capacity // 2                       # per-step working-set budget
    vmem_limit = int(capacity * 0.8)             # scoped limit with headroom below physical

    if block_b is None:
        block_b = _pick_block_b(B, N, F, H, x_itemsize, x_itemsize, budget)
    assert B % block_b == 0
    grid_b = B // block_b

    pooled, a = pl.pallas_call(
        attention_pool_kernel,
        out_shape=(
            jax.ShapeDtypeStruct((B, F), x.dtype),
            jax.ShapeDtypeStruct((B, N), x.dtype),   # lane-dense A; reshaped to (B,N,1) below
        ),
        grid_spec=pltpu.PrefetchScalarGridSpec(
            num_scalar_prefetch=0,
            grid=(grid_b,),
            in_specs=[
                pl.BlockSpec((block_b, N, F), lambda g: (g, 0, 0)),
                pl.BlockSpec((F, H), lambda g: (0, 0)),   # constant index: not re-fetched per step
                pl.BlockSpec((1, H), lambda g: (0, 0)),
            ],
            out_specs=[
                pl.BlockSpec((block_b, F), lambda g: (g, 0)),
                pl.BlockSpec((block_b, N), lambda g: (g, 0)),
            ],
        ),
        compiler_params=pltpu.CompilerParams(
            dimension_semantics=("parallel",),
            vmem_limit_bytes=vmem_limit,
        ),
    )(x, vw, w2)
    return pooled, a.reshape(B, N, 1)


def attention_pool_ref(x, v_weight, w2_weight):
    # Pure-JAX reference mirroring the PyTorch forward exactly.
    B, N, F = x.shape
    xf = x.reshape(-1, F)
    A = jnp.tanh(xf @ v_weight.T) @ w2_weight.T          # (B*N, 1)
    A = A.reshape(B, N, 1)
    w = jax.nn.softmax(A, axis=1)
    pooled = (x * w).sum(axis=1)
    return pooled, A


if __name__ == "__main__":
    key = jax.random.PRNGKey(0)
    k_x, k_v, k_w2, k_x2, k_x3 = jax.random.split(key, 5)

    # Module-scale shapes: n_instances=8, in_features=32, hidden_dim=16.
    B, N, F, H = 2, 8, 32, 16

    x = jax.random.normal(k_x, (B, N, F), dtype=jnp.float32)
    # nn.Linear weight shapes: (out_features, in_features)
    v_weight = 0.1 * jax.random.normal(k_v, (H, F), dtype=jnp.float32)
    w2_weight = 0.1 * jax.random.normal(k_w2, (1, H), dtype=jnp.float32)

    def check(xv):
        pooled, A = attention_pool(xv, v_weight, w2_weight)
        pooled = jax.block_until_ready(pooled)
        A = jax.block_until_ready(A)
        pooled_ref, A_ref = attention_pool_ref(xv, v_weight, w2_weight)
        assert jnp.allclose(pooled, pooled_ref, atol=1e-5, rtol=1e-5)
        assert jnp.allclose(A, A_ref, atol=1e-5, rtol=1e-5)

    # Case 1: B < 8 -> full-batch block (block shapes equal full dims).
    check(x)
    # Case 2: B = 8 -> single 8-aligned block.
    check(jax.random.normal(k_x2, (8, N, F), dtype=jnp.float32))
    # Case 3: B = 32 -> 8-aligned blocks with 4 grid steps (pipelined, megacore-friendly).
    check(jax.random.normal(k_x3, (32, N, F), dtype=jnp.float32))

    print("KERNEL_OK")
</pallas_src>

<mosaic_0001>
module attributes {stable_mosaic.version = 11 : i64} {
  func.func @attention_pool_kernel(%arg0: i32, %arg1: memref<2x8x32xf32, #tpu.memory_space<vmem>>, %arg2: memref<32x16xf32, #tpu.memory_space<vmem>>, %arg3: memref<1x16xf32, #tpu.memory_space<vmem>>, %arg4: memref<2x32xf32, #tpu.memory_space<vmem>>, %arg5: memref<2x8xf32, #tpu.memory_space<vmem>>) attributes {dimension_semantics = [#tpu.dimension_semantics<parallel>], iteration_bounds = array<i64: 1>, scalar_prefetch = 0 : i64, scratch_operands = 0 : i64, tpu.core_type = #tpu.core_type<tc>, window_params = [{transform_indices = @transform_0, window_bounds = array<i64: 2, 8, 32>}, {pipeline_mode = #tpu.pipeline_mode<synchronous>, transform_indices = @transform_1, window_bounds = array<i64: 32, 16>}, {pipeline_mode = #tpu.pipeline_mode<synchronous>, transform_indices = @transform_2, window_bounds = array<i64: 1, 16>}, {transform_indices = @transform_3, window_bounds = array<i64: 2, 32>}, {transform_indices = @transform_4, window_bounds = array<i64: 2, 8>}]} {
    %c0 = arith.constant 0 : index
    %c0_0 = arith.constant 0 : index
    %c0_1 = arith.constant 0 : index
    %0 = vector.load %arg1[%c0, %c0_0, %c0_1] : memref<2x8x32xf32, #tpu.memory_space<vmem>>, vector<2x8x32xf32>
    %1 = vector.shape_cast %0 : vector<2x8x32xf32> to vector<16x32xf32>
    %c0_2 = arith.constant 0 : index
    %c0_3 = arith.constant 0 : index
    %2 = vector.load %arg2[%c0_2, %c0_3] : memref<32x16xf32, #tpu.memory_space<vmem>>, vector<32x16xf32>
    %cst = arith.constant dense<0.000000e+00> : vector<16x16xf32>
    %3 = tpu.matmul %1, %2, %cst {dimension_numbers = #tpu.dot_dimension_numbers<[1], [0], [0], [1], [0, 0, 1, 1], [], []>} : vector<16x32xf32>, vector<32x16xf32>, vector<16x16xf32> -> vector<16x16xf32>
    %4 = math.tanh %3 : vector<16x16xf32>
    %c0_4 = arith.constant 0 : index
    %c0_5 = arith.constant 0 : index
    %5 = vector.load %arg3[%c0_4, %c0_5] : memref<1x16xf32, #tpu.memory_space<vmem>>, vector<1x16xf32>
    %6 = vector.broadcast %5 : vector<1x16xf32> to vector<16x16xf32>
    %7 = arith.mulf %4, %6 : vector<16x16xf32>
    %cst_6 = arith.constant dense<0.000000e+00> : vector<16xf32>
    %8 = vector.multi_reduction <add>, %7, %cst_6 [1] : vector<16x16xf32> to vector<16xf32>
    %9 = vector.shape_cast %8 : vector<16xf32> to vector<16x1xf32>
    %10 = vector.shape_cast %9 : vector<16x1xf32> to vector<2x8xf32>
    %c0_7 = arith.constant 0 : index
    %c0_8 = arith.constant 0 : index
    %11 = vector.load %arg5[%c0_7, %c0_8] : memref<2x8xf32, #tpu.memory_space<vmem>>, vector<2x8xf32>
    tpu.vector_store %arg5[%c0_7, %c0_8], %10 {strides = array<i32>} : memref<2x8xf32, #tpu.memory_space<vmem>>, vector<2x8xf32>,
    %cst_9 = arith.constant dense<0xFF800000> : vector<2xf32>
    %12 = vector.multi_reduction <maximumf>, %10, %cst_9 [1] : vector<2x8xf32> to vector<2xf32>
    %13 = vector.shape_cast %12 : vector<2xf32> to vector<2x1xf32>
    %14 = vector.broadcast %13 : vector<2x1xf32> to vector<2x8xf32>
    %15 = arith.subf %10, %14 : vector<2x8xf32>
    %16 = math.exp %15 : vector<2x8xf32>
    %cst_10 = arith.constant dense<0.000000e+00> : vector<2xf32>
    %17 = vector.multi_reduction <add>, %16, %cst_10 [1] : vector<2x8xf32> to vector<2xf32>
    %18 = vector.shape_cast %17 : vector<2xf32> to vector<2x1xf32>
    %19 = tpu.reciprocal %18 : vector<2x1xf32> -> vector<2x1xf32>
    %20 = vector.broadcast %19 : vector<2x1xf32> to vector<2x8xf32>
    %21 = arith.mulf %16, %20 : vector<2x8xf32>
    %22 = vector.shape_cast %21 : vector<2x8xf32> to vector<2x8x1xf32>
    %23 = vector.broadcast %22 : vector<2x8x1xf32> to vector<2x8x32xf32>
    %24 = arith.mulf %0, %23 : vector<2x8x32xf32>
    %cst_11 = arith.constant dense<0.000000e+00> : vector<2x32xf32>
    %25 = vector.multi_reduction <add>, %24, %cst_11 [1] : vector<2x8x32xf32> to vector<2x32xf32>
    %c0_12 = arith.constant 0 : index
    %c0_13 = arith.constant 0 : index
    %26 = vector.load %arg4[%c0_12, %c0_13] : memref<2x32xf32, #tpu.memory_space<vmem>>, vector<2x32xf32>
    tpu.vector_store %arg4[%c0_12, %c0_13], %25 {strides = array<i32>} : memref<2x32xf32, #tpu.memory_space<vmem>>, vector<2x32xf32>,
    return
  }
  func.func @transform_0(%arg0: i32) -> (i32, i32, i32) {
    %c0_i32 = arith.constant 0 : i32
    %c0_i32_0 = arith.constant 0 : i32
    %c0_i32_1 = arith.constant 0 : i32
    return %arg0, %c0_i32, %c0_i32_0 : i32, i32, i32
  }
  func.func @transform_1(%arg0: i32) -> (i32, i32) {
    %c0_i32 = arith.constant 0 : i32
    %c0_i32_0 = arith.constant 0 : i32
    %c0_i32_1 = arith.constant 0 : i32
    return %c0_i32, %c0_i32_0 : i32, i32
  }
  func.func @transform_2(%arg0: i32) -> (i32, i32) {
    %c0_i32 = arith.constant 0 : i32
    %c0_i32_0 = arith.constant 0 : i32
    %c0_i32_1 = arith.constant 0 : i32
    return %c0_i32, %c0_i32_0 : i32, i32
  }
  func.func @transform_3(%arg0: i32) -> (i32, i32) {
    %c0_i32 = arith.constant 0 : i32
    %c0_i32_0 = arith.constant 0 : i32
    return %arg0, %c0_i32 : i32, i32
  }
  func.func @transform_4(%arg0: i32) -> (i32, i32) {
    %c0_i32 = arith.constant 0 : i32
    %c0_i32_0 = arith.constant 0 : i32
    return %arg0, %c0_i32 : i32, i32
  }
}

</mosaic_0001>

<llo_original>
// kernel: tpu_custom_call.1
$region0: #{tpu_custom_call.1}
  #allocation0 [shape = 'u32[]', space=smem, size = 0x4, offset = 0x4, fixed_abs, tag = 'smem constant byte address 0x4 - core index']
  #allocation1 [shape = 'u32[72,128]{1,0:T(1,128)}', space=vmem, size = 0x9000, scoped, tag = 'internal scratch']
  %s0 = inlined_call_operand.vmem [shape: f32[2,8,32], index: 0, kind: input, shape index: {}]
  %s1 = inlined_call_operand.vmem [shape: f32[32,16], index: 1, kind: input, shape index: {}]
  %s2 = inlined_call_operand.vmem [shape: f32[1,16], index: 2, kind: input, shape index: {}]
  %s3 = inlined_call_operand.hbm [shape: f32[2,32], index: 3, kind: output, shape index: {0}]
  %s4 = inlined_call_operand.hbm [shape: f32[2,8], index: 4, kind: output, shape index: {1}]
  %5 = xla_tuple %s3, %s4
  %s6 = sld [smem:[#allocation0]]
  $region30: #{tpu_custom_call.1} parent=0
    _
  %s8 = ssub.s32 1, %s6
  %s9 = scalar_select 0, %s8, %s6
  $region1: #{tpu_custom_call.1} parent=0
    #allocation2 [shape = 'u8[1024]{0}', space=vmem, size = 0x400, scoped, tag = 'output window, operand 0, single buffered']
    #allocation3 [shape = 's32[1]{0}', space=sflag, size = 0x4, scoped, tag = 'scoped memory for tpu_custom_call.1']
    #allocation4 [shape = 'u8[1024]{0}', space=vmem, size = 0x400, scoped, tag = 'output window, operand 1, single buffered']
    #allocation5 [shape = 's32[1]{0}', space=sflag, size = 0x4, scoped, tag = 'scoped memory for tpu_custom_call.1']
    %10 = vsyncpa [#allocation3], 0
    %11 = vsyncpa [#allocation5], 0
    // Predicated region
    $region2: #{tpu_custom_call.1} parent=1 // pred_check
      _
    $region3: #{tpu_custom_call.1} parent=1 // pred_check_branch
      %13 = sbr.rel (0) target = $region5
    $region4: #{tpu_custom_call.1} parent=1 // pred_region
      _
    $region5: #{tpu_custom_call.1} parent=1 // pred_fallthru
      _
    // Predicated region
    $region6: #{tpu_custom_call.1} parent=1 // pred_check
      _
    $region7: #{tpu_custom_call.1} parent=1 // pred_check_branch
      %15 = sbr.rel (0) target = $region9
    $region8: #{tpu_custom_call.1} parent=1 // pred_region
      _
    $region9: #{tpu_custom_call.1} parent=1 // pred_fallthru
      _
    // Predicated region
    $region10: #{tpu_custom_call.1} parent=1 // pred_check
      _
    $region11: #{tpu_custom_call.1} parent=1 // pred_check_branch
      %17 = sbr.rel (0) target = $region13
    $region12: #{tpu_custom_call.1} parent=1 // pred_region
      _
    $region13: #{tpu_custom_call.1} parent=1 // pred_fallthru
      _
    %v18 = vld [vmem:[%s0] sm:$0xff]
    %v19 = vld [vmem:[%s0 + $0x8] sm:$0xff]
    %v20 = vld [vmem:[%s1] sm:$0xff]
    %v21 = vld [vmem:[%s1 + $0x8] sm:$0xff]
    %v22 = vld [vmem:[%s1 + $0x10] sm:$0xff]
    %v23 = vld [vmem:[%s1 + $0x18] sm:$0xff]
    %vm24 = vcmask 261120
    %v26 = vsel %vm24, %v18, 0
    %v29 = vsel %vm24, %v19, 0
    %31 = vmatpush.msra.mxu0 0.0
    %32 = vmatpush.msra.mxu0 0.0
    %33 = vmatpush.msra.mxu0 0.0
    %34 = vmatpush.msra.mxu0 0.0
    %35 = vmatpush.msra.mxu0 0.0
    %36 = vmatpush.msra.mxu0 0.0
    %37 = vmatpush.msra.mxu0 0.0
    %38 = vmatpush.msra.mxu0 0.0
    %39 = vmatpush.msra.mxu0 0.0
    %40 = vmatpush.msra.mxu0 0.0
    %41 = vmatpush.msra.mxu0 0.0
    %42 = vmatpush.msra.mxu0 0.0
    %43 = vmatpush.msra.mxu0 %v23
    %44 = vmatpush.msra.mxu0 %v22
    %45 = vmatpush.msra.mxu0 %v21
    %46 = vmatpush.msra.mxu0 %v20
    %47 = vmatmul.f32.gmra.mxu0 %v26
    %v48 = vpop.f32.mrf.mxu0
    %v49 = vadd.f32 0.0, %v48
    %50 = vmatmul.f32.gmra.mxu0 %v29
    %v51 = vpop.f32.mrf.mxu0
    %v52 = vadd.f32 0.0, %v51
    %53 = vdwg.mxu0
    %v54 = vtanh.pop %v49
    %v55 = vtanh.pop %v52
    %v56 = vld [vmem:[%s2] sm:$0x1]
    %v58 = vperm.slane %v56, 0
    %v60 = vmul.f32 %v54, %v58
    %v61 = vmul.f32 %v55, %v58
    %vm62 = vcmask 130048
    %v63 = vsel %vm62, %v60, 0.0
    %64 = vadd.xlane.f32.xlu0 %v63
    %v65 = vpop.xlane.xlu0 %64
    %v66 = vsel %vm62, %v61, 0.0
    %67 = vadd.xlane.f32.xlu0 %v66
    %v68 = vpop.xlane.xlu0 %67
    %v71 = vlaneseq
    %v72 = vand.u32 %v71, 127
    %v73 = vperm.slane %v65, %v72
    %v74 = vperm.slane %v68, %v72
    %vm75 = vcmask 1041409
    %v76 = vsel %vm75, %v74, %v73
    %vm78 = vcmask 58368
    %79 = vst.msk [vmem:[#allocation4] sm:$0x3] %vm78, %v76
    %v80 = vsel %vm78, %v76, -inf
    %81 = vmax.xlane.f32.xlu0 %v80
    %v82 = vpop.xlane.xlu0 %81
    %v84 = vperm.slane %v82, 0
    %v85 = vperm.slane %v82, 1
    %v88 = vsub.f32 %v65, %v84
    %v89 = vsub.f32 %v68, %v85
    %v90 = vmul.f32 %v88, 1.442695
    %v91 = vpow.pop %v90
    %v92 = vmul.f32 %v89, 1.442695
    %v93 = vpow.pop %v92
    %96 = vset.pattern.permute.xlu0 0
    %97 = vperm.xlu0 %96, %v91
    %v98 = vpop.permute.xlu0 %97
    %99 = vset.pattern.permute.xlu0 0
    %100 = vperm.xlu0 %99, %v93
    %v101 = vpop.permute.xlu0 %100
    %v102 = vperm.slane %v98, %v72
    %v103 = vperm.slane %v101, %v72
    %v104 = vsel %vm75, %v103, %v102
    %v106 = vsel %vm78, %v104, 0.0
    %107 = vadd.xlane.f32.xlu0 %v106
    %v108 = vpop.xlane.xlu0 %107
    %v109 = vrcp.pop %v108
    %v110 = vmul.f32 %v108, %v109
    %v111 = vsub.f32 1.0, %v110
    %v112 = vmul.f32 %v109, %v111
    %v113 = vadd.f32 %v109, %v112
    %vm114 = vweird.f32 %v108
    %vm115 = vweird.f32 %v109
    %vm116 = vmor %vm114, %vm115
    %v117 = vsel %vm116, %v109, %v113
    %v118 = vand.u32 2147483647, %v108
    %vm119 = vcmp.eq.f32.partialorder %v118, 8.507059e+37
    %v120 = vand.u32 %v108, 2147483648
    %v121 = vor.u32 1.1754944e-38, %v120
    %v122 = vsel %vm119, %v121, %v117
    %v124 = vperm.slane %v122, 0
    %v125 = vperm.slane %v122, 1
    %v128 = vmul.f32 %v91, %v124
    %v129 = vmul.f32 %v93, %v125
    %131 = vset.pattern.permute.xlu0 0
    %132 = vperm.xlu0 %131, %v128
    %v133 = vpop.permute.xlu0 %132
    %136 = vset.pattern.permute.xlu0 0
    %137 = vperm.xlu0 %136, %v129
    %v138 = vpop.permute.xlu0 %137
    %v140 = vmul.f32 %v18, %v133
    %v141 = vmul.f32 %v19, %v138
    %v142 = vsel %vm24, %v140, 0.0
    %v143 = vrot.slane %v142, 4
    %v144 = vadd.f32 %v142, %v143
    %v145 = vrot.slane %v144, 2
    %v146 = vadd.f32 %v144, %v145
    %v147 = vrot.slane %v146, 1
    %v148 = vadd.f32 %v146, %v147
    %v149 = vsel %vm24, %v141, 0.0
    %v150 = vrot.slane %v149, 4
    %v151 = vadd.f32 %v149, %v150
    %v152 = vrot.slane %v151, 2
    %v153 = vadd.f32 %v151, %v152
    %v154 = vrot.slane %v153, 1
    %v155 = vadd.f32 %v153, %v154
    %v158 = vsel %vm75, %v155, %v148
    %vm160 = vcmask 254976
    %161 = vst.msk [vmem:[#allocation2] sm:$0x3] %vm160, %v158
    // Predicated region
    $region14: #{tpu_custom_call.1} parent=1 // pred_check
      _
    $region15: #{tpu_custom_call.1} parent=1 // pred_check_branch
      %163 = sbr.rel (0) target = $region17
    $region16: #{tpu_custom_call.1} parent=1 // pred_region
      %165 = vsyncadd [#allocation3], 0
      %s167 = sshll.u32 [#allocation2], 4
      %s168 = int_to_ptr.vmem [resolvable:$true] %s167
      %s169 = sshll.u32 %s3, 4
      %s170 = int_to_ptr.hbm [resolvable:$true] %s169
      %172 = dma.vmem_to_hbm [thread:$0]  %s168, 32, %s170, [#allocation3]
    $region17: #{tpu_custom_call.1} parent=1 // pred_fallthru
      _
    // Predicated region
    $region18: #{tpu_custom_call.1} parent=1 // pred_check
      _
    $region19: #{tpu_custom_call.1} parent=1 // pred_check_branch
      %174 = sbr.rel (0) target = $region21
    $region20: #{tpu_custom_call.1} parent=1 // pred_region
      %176 = vsyncadd [#allocation5], 0
      %s178 = sshll.u32 [#allocation4], 4
      %s179 = int_to_ptr.vmem [resolvable:$true] %s178
      %s180 = sshll.u32 %s4, 4
      %s181 = int_to_ptr.hbm [resolvable:$true] %s180
      %183 = dma.vmem_to_hbm [thread:$0]  %s179, 32, %s181, [#allocation5]
    $region21: #{tpu_custom_call.1} parent=1 // pred_fallthru
      _
    // Predicated region
    $region22: #{tpu_custom_call.1} parent=1 // pred_check
      _
    $region23: #{tpu_custom_call.1} parent=1 // pred_check_branch
      %185 = sbr.rel (0) target = $region25
    $region24: #{tpu_custom_call.1} parent=1 // pred_region
      %187 = dma.done [#allocation3], 32
    $region25: #{tpu_custom_call.1} parent=1 // pred_fallthru
      _
    // Predicated region
    $region26: #{tpu_custom_call.1} parent=1 // pred_check
      _
    $region27: #{tpu_custom_call.1} parent=1 // pred_check_branch
      %189 = sbr.rel (0) target = $region29
    $region28: #{tpu_custom_call.1} parent=1 // pred_region
      %191 = dma.done [#allocation5], 32
    $region29: #{tpu_custom_call.1} parent=1 // pred_fallthru
      _
    %192 = vsyncpa [#allocation3], 1
    %193 = vsyncpa [#allocation5], 1

</llo_original>
